<compile_context>
chip_gen: v5e
topology: v5e:2x2
jax: 0.10.0
libtpu: 0.0.40
codegen_flags: <defaults>
</compile_context>

<pallas_src>
import functools

import jax
import jax.numpy as jnp
from jax.experimental import pallas as pl
from jax.experimental.pallas import tpu as pltpu


# ---------------------------------------------------------------------------
# Pass 1: Linear1 (no bias -- it cancels in BN) + per-batch-tile BN statistics
#   grid = (batch tiles [parallel], H tiles [parallel], K=D tiles [arbitrary])
# ---------------------------------------------------------------------------
def _linear1_stats_kernel(x_ref, w1_ref, h_ref, sum_ref, ssq_ref, acc_ref):
    k = pl.program_id(2)
    nk = pl.num_programs(2)

    # bf16 operands, f32 accumulation on the MXU.
    prod = jnp.dot(x_ref[...], w1_ref[...], preferred_element_type=jnp.float32)

    @pl.when(k == 0)
    def _():
        acc_ref[...] = prod          # init with first partial product

    @pl.when(k != 0)
    def _():
        acc_ref[...] += prod

    @pl.when(k == nk - 1)
    def _():
        z = acc_ref[...]                                   # f32, bias-free
        h_ref[...] = z.astype(h_ref.dtype)                 # bf16 writeback
        # Per-(batch-tile, H-tile) partial stats; padded batch rows are exactly
        # zero (zero x rows) so they contribute nothing -- no correction needed.
        # NOTE: variance later uses E[z^2]-E[z]^2; stats are bias-free (b1 is
        # never added) which keeps the cancellation mild.
        sum_ref[...] = jnp.sum(z, axis=0, keepdims=True)[None]
        ssq_ref[...] = jnp.sum(z * z, axis=0, keepdims=True)[None]


# ---------------------------------------------------------------------------
# Pass 2: BN apply (pre-folded scale/shift) + ReLU + Linear2
#   grid = (batch tiles [parallel], P tiles [parallel], H tiles [arbitrary])
# ---------------------------------------------------------------------------
def _bn_relu_linear2_kernel(h_ref, scale_ref, shift_ref, w2_ref, b2_ref,
                            o_ref, acc_ref, *, block_h, block_p):
    j = pl.program_id(1)
    k = pl.program_id(2)
    nk = pl.num_programs(2)

    # scale/shift/b2 are full-width resident blocks; slice the current tile.
    koff = pl.multiple_of(k * block_h, 128)
    scale = scale_ref[:, pl.ds(koff, block_h)]
    shift = shift_ref[:, pl.ds(koff, block_h)]

    # BN/ReLU elementwise math in f32 (required on v5e); cast back to bf16 for
    # the full-rate MXU path.
    a = h_ref[...].astype(jnp.float32) * scale + shift
    a = jnp.maximum(a, 0.0)
    prod = jnp.dot(a.astype(w2_ref.dtype), w2_ref[...],
                   preferred_element_type=jnp.float32)

    @pl.when(k == 0)
    def _():
        acc_ref[...] = prod          # init with first partial product

    @pl.when(k != 0)
    def _():
        acc_ref[...] += prod

    @pl.when(k == nk - 1)
    def _():
        joff = pl.multiple_of(j * block_p, 128)
        o_ref[...] = (acc_ref[...] + b2_ref[:, pl.ds(joff, block_p)]
                      ).astype(o_ref.dtype)


# ---------------------------------------------------------------------------
# Host-side helpers
# ---------------------------------------------------------------------------
def _round_up(x, m):
    return (x + m - 1) // m * m


def _pick_tile(padded_dim, target):
    """Largest multiple of 128 <= target that divides padded_dim (a multiple
    of 128)."""
    t = min(target, padded_dim)
    t = max(128, t // 128 * 128)
    while padded_dim % t:
        t -= 128
    return t


def _pick_batch_tile(B, max_tile=512):
    """Batch tile: multiple of 8, <= max_tile, minimizing padding waste."""
    b8 = _round_up(B, 8)
    if b8 <= max_tile:
        return b8
    best_tb = max_tile
    best_pad = _round_up(B, max_tile) - B
    if best_pad:
        for tb in range(max_tile, 127, -8):
            pad = _round_up(B, tb) - B
            if pad < best_pad:
                best_tb, best_pad = tb, pad
                if pad == 0:
                    break
    return best_tb


def mlp_forward(x, w1, b1, gamma, beta, w2, b2, *, eps=1e-5):
    """x: [B, D]; w1: [D, H]; b1/gamma/beta: [1, H]; w2: [H, P]; b2: [1, P].

    b1 is accepted for API parity but cancels exactly inside training-mode
    BatchNorm, so it never enters the computation.
    """
    del b1
    B, D = x.shape
    H = w1.shape[1]
    P = w2.shape[1]
    out_dtype = x.dtype
    f32 = jnp.float32
    bf16 = jnp.bfloat16

    # ---- pad to hardware-friendly sizes (lane-dense last dims >= 128) ----
    Dp = _round_up(D, 128)
    Hp = _round_up(H, 128)
    Pp = _round_up(P, 128)

    TB = _pick_batch_tile(B, 512)          # batch tile (multiple of 8)
    Bp = _round_up(B, TB)
    nb = Bp // TB

    TD = _pick_tile(Dp, 1024)              # K tile of matmul 1 (often == Dp)
    th_target = 512
    if nb == 1 and Hp >= 256:              # keep >=2 blocks on a parallel axis
        th_target = min(th_target, Hp // 2)
    TH = _pick_tile(Hp, th_target)         # N tile of mm1 == K tile of mm2
    tp_target = 512
    if nb == 1 and Pp >= 256:
        tp_target = min(tp_target, Pp // 2)
    TP = _pick_tile(Pp, tp_target)         # N tile of mm2 (lane-dense output)

    nh, nk1 = Hp // TH, Dp // TD
    npj, nk2 = Pp // TP, Hp // TH

    # ---- bf16 matmul operands (full MXU rate), f32 for BN vectors ----
    xp = jnp.pad(x, ((0, Bp - B), (0, Dp - D))).astype(bf16)
    w1p = jnp.pad(w1, ((0, Dp - D), (0, Hp - H))).astype(bf16)
    w2p = jnp.pad(w2, ((0, Hp - H), (0, Pp - P))).astype(bf16)
    gp = jnp.pad(gamma.astype(f32), ((0, 0), (0, Hp - H)))
    bp = jnp.pad(beta.astype(f32), ((0, 0), (0, Hp - H)))
    b2p = jnp.pad(b2.astype(f32), ((0, 0), (0, Pp - P)))

    # ---------------- pass 1: Linear1 + per-tile batch statistics ----------
    h_pad, psum, pssq = pl.pallas_call(
        _linear1_stats_kernel,
        grid=(nb, nh, nk1),
        in_specs=[
            pl.BlockSpec((TB, TD), lambda b, h, k: (b, k)),     # x
            pl.BlockSpec((TD, TH), lambda b, h, k: (k, h)),     # w1
        ],
        out_specs=[
            pl.BlockSpec((TB, TH), lambda b, h, k: (b, h)),     # z (=h w/o b1)
            pl.BlockSpec((1, 1, TH), lambda b, h, k: (b, 0, h)),  # partial sum
            pl.BlockSpec((1, 1, TH), lambda b, h, k: (b, 0, h)),  # partial ssq
        ],
        out_shape=[
            jax.ShapeDtypeStruct((Bp, Hp), bf16),
            jax.ShapeDtypeStruct((nb, 1, Hp), f32),
            jax.ShapeDtypeStruct((nb, 1, Hp), f32),
        ],
        scratch_shapes=[pltpu.VMEM((TB, TH), f32)],
        compiler_params=pltpu.CompilerParams(
            dimension_semantics=("parallel", "parallel", "arbitrary"),
            vmem_limit_bytes=32 * 1024 * 1024,
        ),
        cost_estimate=pl.CostEstimate(
            flops=2 * Bp * Dp * Hp,
            transcendentals=0,
            bytes_accessed=2 * (Bp * Dp + Dp * Hp + Bp * Hp),
        ),
    )(xp, w1p)

    # ---- fold BN into a single (scale, shift) pair (tiny [nb, Hp] math) ----
    col_sum = jnp.sum(psum, axis=0)                   # (1, Hp)
    col_ssq = jnp.sum(pssq, axis=0)
    mean = col_sum / B
    var = jnp.maximum(col_ssq / B - mean * mean, 0.0)
    inv_std = jax.lax.rsqrt(var + eps)
    scale = gp * inv_std
    shift = bp - mean * scale

    # ---------------- pass 2: BN apply + ReLU + Linear2 ----------------
    kernel2 = functools.partial(_bn_relu_linear2_kernel, block_h=TH, block_p=TP)
    out_p = pl.pallas_call(
        kernel2,
        grid=(nb, npj, nk2),
        in_specs=[
            pl.BlockSpec((TB, TH), lambda i, j, k: (i, k)),     # z
            pl.BlockSpec((1, Hp), lambda i, j, k: (0, 0)),      # scale (resident)
            pl.BlockSpec((1, Hp), lambda i, j, k: (0, 0)),      # shift (resident)
            pl.BlockSpec((TH, TP), lambda i, j, k: (k, j)),     # w2
            pl.BlockSpec((1, Pp), lambda i, j, k: (0, 0)),      # b2 (resident)
        ],
        out_specs=pl.BlockSpec((TB, TP), lambda i, j, k: (i, j)),
        out_shape=jax.ShapeDtypeStruct((Bp, Pp), out_dtype),
        scratch_shapes=[pltpu.VMEM((TB, TP), f32)],
        compiler_params=pltpu.CompilerParams(
            dimension_semantics=("parallel", "parallel", "arbitrary"),
            vmem_limit_bytes=32 * 1024 * 1024,
        ),
        cost_estimate=pl.CostEstimate(
            flops=2 * Bp * Hp * Pp,
            transcendentals=0,
            bytes_accessed=(2 * (Bp * Hp + Hp * Pp)
                            + Bp * Pp * jnp.dtype(out_dtype).itemsize),
        ),
    )(h_pad, scale, shift, w2p, b2p)

    return out_p[:B, :P]


# ---------------------------------------------------------------------------
# Reference & init (PyTorch-equivalent semantics)
# ---------------------------------------------------------------------------
def init_params(key, dim, hidden_size, projection_size):
    """PyTorch-like init: Linear uniform(+/- 1/sqrt(fan_in)), BN gamma=1, beta=0.
    Weights stored pre-transposed to [in, out]."""
    k1, k2, k3, k4 = jax.random.split(key, 4)
    bound1 = 1.0 / (dim ** 0.5)
    bound2 = 1.0 / (hidden_size ** 0.5)
    w1 = jax.random.uniform(k1, (dim, hidden_size), jnp.float32, -bound1, bound1)
    b1 = jax.random.uniform(k2, (1, hidden_size), jnp.float32, -bound1, bound1)
    gamma = jnp.ones((1, hidden_size), jnp.float32)
    beta = jnp.zeros((1, hidden_size), jnp.float32)
    w2 = jax.random.uniform(k3, (hidden_size, projection_size), jnp.float32, -bound2, bound2)
    b2 = jax.random.uniform(k4, (1, projection_size), jnp.float32, -bound2, bound2)
    return w1, b1, gamma, beta, w2, b2


def reference_forward(x, w1, b1, gamma, beta, w2, b2, eps=1e-5):
    h = x @ w1 + b1
    mean = jnp.mean(h, axis=0, keepdims=True)
    var = jnp.mean((h - mean) ** 2, axis=0, keepdims=True)
    h = (h - mean) * jax.lax.rsqrt(var + eps) * gamma + beta
    h = jnp.maximum(h, 0.0)
    return h @ w2 + b2


if __name__ == "__main__":
    # Small shapes consistent with MLP(dim=32, projection_size=16, hidden_size=64)
    batch, dim, hidden, proj = 8, 32, 64, 16

    key = jax.random.PRNGKey(0)
    kx, kp = jax.random.split(key)
    x = jax.random.normal(kx, (batch, dim), jnp.float32)
    params = init_params(kp, dim, hidden, proj)
    w1, b1, gamma, beta, w2, b2 = params

    out = jax.jit(mlp_forward)(x, *params)
    jax.block_until_ready(out)
    assert out.shape == (batch, proj)

    # Tight check: reference with the same bf16 operand rounding the kernel
    # deliberately uses (isolates kernel-logic error from the bf16 cast).
    q = lambda a: a.astype(jnp.bfloat16).astype(jnp.float32)
    ref_bf16 = reference_forward(q(x), q(w1), b1, gamma, beta, q(w2), b2)
    assert jnp.allclose(out, ref_bf16, atol=2e-2, rtol=2e-2), \
        "mismatch vs bf16-operand reference"

    # Loose check vs the full-f32 module semantics (kernel uses bf16 MXU
    # operands and a bf16 intermediate, per the perf guidance).
    ref_f32 = reference_forward(x, *params)
    assert jnp.allclose(out, ref_f32, atol=5e-2, rtol=5e-2), \
        "mismatch vs f32 reference"

    print("KERNEL_OK")
</pallas_src>

<mosaic_0001>
module attributes {stable_mosaic.version = 11 : i64} {
  func.func @_linear1_stats_kernel(%arg0: i32, %arg1: i32, %arg2: i32, %arg3: memref<8x128xbf16, #tpu.memory_space<vmem>>, %arg4: memref<128x128xbf16, #tpu.memory_space<vmem>>, %arg5: memref<8x128xbf16, #tpu.memory_space<vmem>>, %arg6: memref<1x1x128xf32, #tpu.memory_space<vmem>>, %arg7: memref<1x1x128xf32, #tpu.memory_space<vmem>>, %arg8: memref<8x128xf32, #tpu.memory_space<vmem>>) attributes {dimension_semantics = [#tpu.dimension_semantics<parallel>, #tpu.dimension_semantics<parallel>, #tpu.dimension_semantics<arbitrary>], iteration_bounds = array<i64: 1, 1, 1>, scalar_prefetch = 0 : i64, scratch_operands = 1 : i64, tpu.core_type = #tpu.core_type<tc>, window_params = [{transform_indices = @transform_0, window_bounds = array<i64: 8, 128>}, {transform_indices = @transform_1, window_bounds = array<i64: 128, 128>}, {transform_indices = @transform_2, window_bounds = array<i64: 8, 128>}, {transform_indices = @transform_3, window_bounds = array<i64: 1, 1, 128>}, {transform_indices = @transform_4, window_bounds = array<i64: 1, 1, 128>}]} {
    %c0 = arith.constant 0 : index
    %c0_0 = arith.constant 0 : index
    %0 = vector.load %arg3[%c0, %c0_0] : memref<8x128xbf16, #tpu.memory_space<vmem>>, vector<8x128xbf16>
    %c0_1 = arith.constant 0 : index
    %c0_2 = arith.constant 0 : index
    %1 = vector.load %arg4[%c0_1, %c0_2] : memref<128x128xbf16, #tpu.memory_space<vmem>>, vector<128x128xbf16>
    %cst = arith.constant dense<0.000000e+00> : vector<8x128xf32>
    %2 = tpu.matmul %0, %1, %cst {dimension_numbers = #tpu.dot_dimension_numbers<[1], [0], [0], [1], [0, 0, 1, 1], [], []>} : vector<8x128xbf16>, vector<128x128xbf16>, vector<8x128xf32> -> vector<8x128xf32>
    %c0_i32 = arith.constant 0 : i32
    %3 = arith.cmpi eq, %arg2, %c0_i32 : i32
    %4 = arith.extui %3 : i1 to i32
    %c0_i32_3 = arith.constant 0 : i32
    %5 = arith.cmpi ne, %4, %c0_i32_3 : i32
    scf.if %5 {
      %c0_8 = arith.constant 0 : index
      %c0_9 = arith.constant 0 : index
      %12 = vector.load %arg8[%c0_8, %c0_9] : memref<8x128xf32, #tpu.memory_space<vmem>>, vector<8x128xf32>
      tpu.vector_store %arg8[%c0_8, %c0_9], %2 {strides = array<i32>} : memref<8x128xf32, #tpu.memory_space<vmem>>, vector<8x128xf32>,
    } else {
    }
    %c0_i32_4 = arith.constant 0 : i32
    %6 = arith.cmpi ne, %arg2, %c0_i32_4 : i32
    %7 = arith.extui %6 : i1 to i32
    %c0_i32_5 = arith.constant 0 : i32
    %8 = arith.cmpi ne, %7, %c0_i32_5 : i32
    scf.if %8 {
      %c0_8 = arith.constant 0 : index
      %c0_9 = arith.constant 0 : index
      %12 = vector.load %arg8[%c0_8, %c0_9] : memref<8x128xf32, #tpu.memory_space<vmem>>, vector<8x128xf32>
      %13 = arith.addf %12, %2 : vector<8x128xf32>
      %c0_10 = arith.constant 0 : index
      %c0_11 = arith.constant 0 : index
      %14 = vector.load %arg8[%c0_10, %c0_11] : memref<8x128xf32, #tpu.memory_space<vmem>>, vector<8x128xf32>
      tpu.vector_store %arg8[%c0_10, %c0_11], %13 {strides = array<i32>} : memref<8x128xf32, #tpu.memory_space<vmem>>, vector<8x128xf32>,
    } else {
    }
    %c0_i32_6 = arith.constant 0 : i32
    %9 = arith.cmpi eq, %arg2, %c0_i32_6 : i32
    %10 = arith.extui %9 : i1 to i32
    %c0_i32_7 = arith.constant 0 : i32
    %11 = arith.cmpi ne, %10, %c0_i32_7 : i32
    scf.if %11 {
      %c0_8 = arith.constant 0 : index
      %c0_9 = arith.constant 0 : index
      %12 = vector.load %arg8[%c0_8, %c0_9] : memref<8x128xf32, #tpu.memory_space<vmem>>, vector<8x128xf32>
      %13 = arith.truncf %12 : vector<8x128xf32> to vector<8x128xbf16>
      %c0_10 = arith.constant 0 : index
      %c0_11 = arith.constant 0 : index
      %14 = vector.load %arg5[%c0_10, %c0_11] : memref<8x128xbf16, #tpu.memory_space<vmem>>, vector<8x128xbf16>
      tpu.vector_store %arg5[%c0_10, %c0_11], %13 {strides = array<i32>} : memref<8x128xbf16, #tpu.memory_space<vmem>>, vector<8x128xbf16>,
      %cst_12 = arith.constant dense<0.000000e+00> : vector<128xf32>
      %15 = vector.multi_reduction <add>, %12, %cst_12 [0] : vector<8x128xf32> to vector<128xf32>
      %16 = vector.shape_cast %15 : vector<128xf32> to vector<1x128xf32>
      %17 = vector.shape_cast %16 : vector<1x128xf32> to vector<1x1x128xf32>
      %c0_13 = arith.constant 0 : index
      %c0_14 = arith.constant 0 : index
      %c0_15 = arith.constant 0 : index
      %18 = vector.load %arg6[%c0_13, %c0_14, %c0_15] : memref<1x1x128xf32, #tpu.memory_space<vmem>>, vector<1x1x128xf32>
      tpu.vector_store %arg6[%c0_13, %c0_14, %c0_15], %17 {strides = array<i32>} : memref<1x1x128xf32, #tpu.memory_space<vmem>>, vector<1x1x128xf32>,
      %19 = arith.mulf %12, %12 : vector<8x128xf32>
      %cst_16 = arith.constant dense<0.000000e+00> : vector<128xf32>
      %20 = vector.multi_reduction <add>, %19, %cst_16 [0] : vector<8x128xf32> to vector<128xf32>
      %21 = vector.shape_cast %20 : vector<128xf32> to vector<1x128xf32>
      %22 = vector.shape_cast %21 : vector<1x128xf32> to vector<1x1x128xf32>
      %c0_17 = arith.constant 0 : index
      %c0_18 = arith.constant 0 : index
      %c0_19 = arith.constant 0 : index
      %23 = vector.load %arg7[%c0_17, %c0_18, %c0_19] : memref<1x1x128xf32, #tpu.memory_space<vmem>>, vector<1x1x128xf32>
      tpu.vector_store %arg7[%c0_17, %c0_18, %c0_19], %22 {strides = array<i32>} : memref<1x1x128xf32, #tpu.memory_space<vmem>>, vector<1x1x128xf32>,
    } else {
    }
    return
  }
  func.func @transform_0(%arg0: i32, %arg1: i32, %arg2: i32) -> (i32, i32) {
    %c0_i32 = arith.constant 0 : i32
    return %arg0, %arg2 : i32, i32
  }
  func.func @transform_1(%arg0: i32, %arg1: i32, %arg2: i32) -> (i32, i32) {
    %c0_i32 = arith.constant 0 : i32
    return %arg2, %arg1 : i32, i32
  }
  func.func @transform_2(%arg0: i32, %arg1: i32, %arg2: i32) -> (i32, i32) {
    %c0_i32 = arith.constant 0 : i32
    return %arg0, %arg1 : i32, i32
  }
  func.func @transform_3(%arg0: i32, %arg1: i32, %arg2: i32) -> (i32, i32, i32) {
    %c0_i32 = arith.constant 0 : i32
    %c0_i32_0 = arith.constant 0 : i32
    return %arg0, %c0_i32, %arg1 : i32, i32, i32
  }
  func.func @transform_4(%arg0: i32, %arg1: i32, %arg2: i32) -> (i32, i32, i32) {
    %c0_i32 = arith.constant 0 : i32
    %c0_i32_0 = arith.constant 0 : i32
    return %arg0, %c0_i32, %arg1 : i32, i32, i32
  }
}

module attributes {stable_mosaic.version = 11 : i64} {
  func.func @_bn_relu_linear2_kernel(%arg0: i32, %arg1: i32, %arg2: i32, %arg3: memref<8x128xbf16, #tpu.memory_space<vmem>>, %arg4: memref<1x128xf32, #tpu.memory_space<vmem>>, %arg5: memref<1x128xf32, #tpu.memory_space<vmem>>, %arg6: memref<128x128xbf16, #tpu.memory_space<vmem>>, %arg7: memref<1x128xf32, #tpu.memory_space<vmem>>, %arg8: memref<8x128xf32, #tpu.memory_space<vmem>>, %arg9: memref<8x128xf32, #tpu.memory_space<vmem>>) attributes {dimension_semantics = [#tpu.dimension_semantics<parallel>, #tpu.dimension_semantics<parallel>, #tpu.dimension_semantics<arbitrary>], iteration_bounds = array<i64: 1, 1, 1>, scalar_prefetch = 0 : i64, scratch_operands = 1 : i64, tpu.core_type = #tpu.core_type<tc>, window_params = [{transform_indices = @transform_0, window_bounds = array<i64: 8, 128>}, {pipeline_mode = #tpu.pipeline_mode<synchronous>, transform_indices = @transform_1, window_bounds = array<i64: 1, 128>}, {pipeline_mode = #tpu.pipeline_mode<synchronous>, transform_indices = @transform_2, window_bounds = array<i64: 1, 128>}, {transform_indices = @transform_3, window_bounds = array<i64: 128, 128>}, {pipeline_mode = #tpu.pipeline_mode<synchronous>, transform_indices = @transform_4, window_bounds = array<i64: 1, 128>}, {transform_indices = @transform_5, window_bounds = array<i64: 8, 128>}]} {
    %c128_i32 = arith.constant 128 : i32
    %0 = arith.muli %arg2, %c128_i32 : i32
    %1 = tpu.assume_multiple %0, 128 : i32
    %c0 = arith.constant 0 : index
    %2 = arith.index_cast %1 : i32 to index
    %3 = vector.load %arg4[%c0, %2] : memref<1x128xf32, #tpu.memory_space<vmem>>, vector<1x128xf32>
    %c0_0 = arith.constant 0 : index
    %4 = arith.index_cast %1 : i32 to index
    %5 = vector.load %arg5[%c0_0, %4] : memref<1x128xf32, #tpu.memory_space<vmem>>, vector<1x128xf32>
    %c0_1 = arith.constant 0 : index
    %c0_2 = arith.constant 0 : index
    %6 = vector.load %arg3[%c0_1, %c0_2] : memref<8x128xbf16, #tpu.memory_space<vmem>>, vector<8x128xbf16>
    %7 = arith.extf %6 : vector<8x128xbf16> to vector<8x128xf32>
    %8 = vector.broadcast %3 : vector<1x128xf32> to vector<8x128xf32>
    %9 = arith.mulf %7, %8 : vector<8x128xf32>
    %10 = vector.broadcast %5 : vector<1x128xf32> to vector<8x128xf32>
    %11 = arith.addf %9, %10 : vector<8x128xf32>
    %cst = arith.constant 0.000000e+00 : f32
    %12 = vector.broadcast %cst : f32 to vector<8x128xf32>
    %13 = arith.maximumf %11, %12 : vector<8x128xf32>
    %14 = arith.truncf %13 : vector<8x128xf32> to vector<8x128xbf16>
    %c0_3 = arith.constant 0 : index
    %c0_4 = arith.constant 0 : index
    %15 = vector.load %arg6[%c0_3, %c0_4] : memref<128x128xbf16, #tpu.memory_space<vmem>>, vector<128x128xbf16>
    %cst_5 = arith.constant dense<0.000000e+00> : vector<8x128xf32>
    %16 = tpu.matmul %14, %15, %cst_5 {dimension_numbers = #tpu.dot_dimension_numbers<[1], [0], [0], [1], [0, 0, 1, 1], [], []>} : vector<8x128xbf16>, vector<128x128xbf16>, vector<8x128xf32> -> vector<8x128xf32>
    %c0_i32 = arith.constant 0 : i32
    %17 = arith.cmpi eq, %arg2, %c0_i32 : i32
    %18 = arith.extui %17 : i1 to i32
    %c0_i32_6 = arith.constant 0 : i32
    %19 = arith.cmpi ne, %18, %c0_i32_6 : i32
    scf.if %19 {
      %c0_11 = arith.constant 0 : index
      %c0_12 = arith.constant 0 : index
      %26 = vector.load %arg9[%c0_11, %c0_12] : memref<8x128xf32, #tpu.memory_space<vmem>>, vector<8x128xf32>
      tpu.vector_store %arg9[%c0_11, %c0_12], %16 {strides = array<i32>} : memref<8x128xf32, #tpu.memory_space<vmem>>, vector<8x128xf32>,
    } else {
    }
    %c0_i32_7 = arith.constant 0 : i32
    %20 = arith.cmpi ne, %arg2, %c0_i32_7 : i32
    %21 = arith.extui %20 : i1 to i32
    %c0_i32_8 = arith.constant 0 : i32
    %22 = arith.cmpi ne, %21, %c0_i32_8 : i32
    scf.if %22 {
      %c0_11 = arith.constant 0 : index
      %c0_12 = arith.constant 0 : index
      %26 = vector.load %arg9[%c0_11, %c0_12] : memref<8x128xf32, #tpu.memory_space<vmem>>, vector<8x128xf32>
      %27 = arith.addf %26, %16 : vector<8x128xf32>
      %c0_13 = arith.constant 0 : index
      %c0_14 = arith.constant 0 : index
      %28 = vector.load %arg9[%c0_13, %c0_14] : memref<8x128xf32, #tpu.memory_space<vmem>>, vector<8x128xf32>
      tpu.vector_store %arg9[%c0_13, %c0_14], %27 {strides = array<i32>} : memref<8x128xf32, #tpu.memory_space<vmem>>, vector<8x128xf32>,
    } else {
    }
    %c0_i32_9 = arith.constant 0 : i32
    %23 = arith.cmpi eq, %arg2, %c0_i32_9 : i32
    %24 = arith.extui %23 : i1 to i32
    %c0_i32_10 = arith.constant 0 : i32
    %25 = arith.cmpi ne, %24, %c0_i32_10 : i32
    scf.if %25 {
      %c128_i32_11 = arith.constant 128 : i32
      %26 = arith.muli %arg1, %c128_i32_11 : i32
      %27 = tpu.assume_multiple %26, 128 : i32
      %c0_12 = arith.constant 0 : index
      %c0_13 = arith.constant 0 : index
      %28 = vector.load %arg9[%c0_12, %c0_13] : memref<8x128xf32, #tpu.memory_space<vmem>>, vector<8x128xf32>
      %c0_14 = arith.constant 0 : index
      %29 = arith.index_cast %27 : i32 to index
      %30 = vector.load %arg7[%c0_14, %29] : memref<1x128xf32, #tpu.memory_space<vmem>>, vector<1x128xf32>
      %31 = vector.broadcast %30 : vector<1x128xf32> to vector<8x128xf32>
      %32 = arith.addf %28, %31 : vector<8x128xf32>
      %c0_15 = arith.constant 0 : index
      %c0_16 = arith.constant 0 : index
      %33 = vector.load %arg8[%c0_15, %c0_16] : memref<8x128xf32, #tpu.memory_space<vmem>>, vector<8x128xf32>
      tpu.vector_store %arg8[%c0_15, %c0_16], %32 {strides = array<i32>} : memref<8x128xf32, #tpu.memory_space<vmem>>, vector<8x128xf32>,
    } else {
    }
    return
  }
  func.func @transform_0(%arg0: i32, %arg1: i32, %arg2: i32) -> (i32, i32) {
    %c0_i32 = arith.constant 0 : i32
    return %arg0, %arg2 : i32, i32
  }
  func.func @transform_1(%arg0: i32, %arg1: i32, %arg2: i32) -> (i32, i32) {
    %c0_i32 = arith.constant 0 : i32
    %c0_i32_0 = arith.constant 0 : i32
    %c0_i32_1 = arith.constant 0 : i32
    return %c0_i32, %c0_i32_0 : i32, i32
  }
  func.func @transform_2(%arg0: i32, %arg1: i32, %arg2: i32) -> (i32, i32) {
    %c0_i32 = arith.constant 0 : i32
    %c0_i32_0 = arith.constant 0 : i32
    %c0_i32_1 = arith.constant 0 : i32
    return %c0_i32, %c0_i32_0 : i32, i32
  }
  func.func @transform_3(%arg0: i32, %arg1: i32, %arg2: i32) -> (i32, i32) {
    %c0_i32 = arith.constant 0 : i32
    return %arg2, %arg1 : i32, i32
  }
  func.func @transform_4(%arg0: i32, %arg1: i32, %arg2: i32) -> (i32, i32) {
    %c0_i32 = arith.constant 0 : i32
    %c0_i32_0 = arith.constant 0 : i32
    %c0_i32_1 = arith.constant 0 : i32
    return %c0_i32, %c0_i32_0 : i32, i32
  }
  func.func @transform_5(%arg0: i32, %arg1: i32, %arg2: i32) -> (i32, i32) {
    %c0_i32 = arith.constant 0 : i32
    return %arg0, %arg1 : i32, i32
  }
}

</mosaic_0001>

<llo_original>
// kernel: mlp_forward.2
$region0: #{mlp_forward.2}
  #allocation0 [shape = 'u32[]', space=smem, size = 0x4, offset = 0x4, fixed_abs, tag = 'smem constant byte address 0x4 - core index']
  #allocation1 [shape = 'u32[72,128]{1,0:T(1,128)}', space=vmem, size = 0x9000, scoped, tag = 'internal scratch']
  #allocation2 [shape = 'f32[8,128]{1,0:T(8,128)}', space=vmem, size = 0x1000, scoped, tag = 'scratch operand']
  %s0 = inlined_call_operand.vmem [shape: bf16[8,128], index: 0, kind: input, shape index: {}]
  %s1 = inlined_call_operand.vmem [shape: bf16[128,128], index: 1, kind: input, shape index: {}]
  %s2 = inlined_call_operand.vmem [shape: bf16[8,128], index: 2, kind: output, shape index: {0}]
  %s3 = inlined_call_operand.vmem [shape: f32[1,1,128], index: 3, kind: output, shape index: {1}]
  %s4 = inlined_call_operand.vmem [shape: f32[1,1,128], index: 4, kind: output, shape index: {2}]
  %5 = xla_tuple %s2, %s3, %s4
  %s6 = sld [smem:[#allocation0]]
  $region46: #{mlp_forward.2} parent=0
    _
  %s8 = ssub.s32 1, %s6
  %s9 = scalar_select 0, %s8, %s6
  // Predicated region
  $region2: #{mlp_forward.2} parent=0 // pred_check
    _
  $region3: #{mlp_forward.2} parent=0 // pred_check_branch
    %11 = sbr.rel (0) target = $region5
  $region4: #{mlp_forward.2} parent=0 // pred_region
    _
  $region5: #{mlp_forward.2} parent=0 // pred_fallthru
    _
  // Predicated region
  $region6: #{mlp_forward.2} parent=0 // pred_check
    _
  $region7: #{mlp_forward.2} parent=0 // pred_check_branch
    %13 = sbr.rel (0) target = $region9
  $region8: #{mlp_forward.2} parent=0 // pred_region
    _
  $region9: #{mlp_forward.2} parent=0 // pred_fallthru
    _
  %v14 = vld [vmem:[%s0] sm:$0xf]
  %v15 = vld [vmem:[%s1] sm:$0xf]
  %v16 = vld [vmem:[%s1 + $0x4] sm:$0xf]
  %v17 = vld [vmem:[%s1 + $0x8] sm:$0xf]
  %v18 = vld [vmem:[%s1 + $0xc] sm:$0xf]
  %v19 = vld [vmem:[%s1 + $0x10] sm:$0xf]
  %v20 = vld [vmem:[%s1 + $0x14] sm:$0xf]
  %v21 = vld [vmem:[%s1 + $0x18] sm:$0xf]
  %v22 = vld [vmem:[%s1 + $0x1c] sm:$0xf]
  %v23 = vld [vmem:[%s1 + $0x20] sm:$0xf]
  %v24 = vld [vmem:[%s1 + $0x24] sm:$0xf]
  %v25 = vld [vmem:[%s1 + $0x28] sm:$0xf]
  %v26 = vld [vmem:[%s1 + $0x2c] sm:$0xf]
  %v27 = vld [vmem:[%s1 + $0x30] sm:$0xf]
  %v28 = vld [vmem:[%s1 + $0x34] sm:$0xf]
  %v29 = vld [vmem:[%s1 + $0x38] sm:$0xf]
  %v30 = vld [vmem:[%s1 + $0x3c] sm:$0xf]
  %v47 = vunpack.c.l.b16 %v15
  %v48 = vunpack.c.l.b16 %v16
  %v49 = vunpack.c.l.b16 %v17
  %v50 = vunpack.c.l.b16 %v18
  %v51 = vunpack.c.l.b16 %v19
  %v52 = vunpack.c.l.b16 %v20
  %v53 = vunpack.c.l.b16 %v21
  %v54 = vunpack.c.l.b16 %v22
  %v55 = vunpack.c.l.b16 %v23
  %v56 = vunpack.c.l.b16 %v24
  %v57 = vunpack.c.l.b16 %v25
  %v58 = vunpack.c.l.b16 %v26
  %v59 = vunpack.c.l.b16 %v27
  %v60 = vunpack.c.l.b16 %v28
  %v61 = vunpack.c.l.b16 %v29
  %v62 = vunpack.c.l.b16 %v30
  %v63 = vpack.c.b16 %v48, %v47
  %v64 = vpack.c.b16 %v50, %v49
  %v65 = vpack.c.b16 %v52, %v51
  %v66 = vpack.c.b16 %v54, %v53
  %v67 = vpack.c.b16 %v56, %v55
  %v68 = vpack.c.b16 %v58, %v57
  %v69 = vpack.c.b16 %v60, %v59
  %v70 = vpack.c.b16 %v62, %v61
  %79 = vmatpush.bf16.msra.mxu0 %v70
  %80 = vmatpush.bf16.msra.mxu0 %v69
  %81 = vmatpush.bf16.msra.mxu0 %v68
  %82 = vmatpush.bf16.msra.mxu0 %v67
  %83 = vmatpush.bf16.msra.mxu0 %v66
  %84 = vmatpush.bf16.msra.mxu0 %v65
  %85 = vmatpush.bf16.msra.mxu0 %v64
  %86 = vmatpush.bf16.msra.mxu0 %v63
  %87 = vmatmul.bf16.gmra.mxu0 %v14
  %v88 = vpop.f32.mrf.mxu0
  %v89 = vadd.f32 0.0, %v88
  %v90 = vpop.f32.mrf.mxu0
  %91 = vdwg.mxu0
  %p92 = scmp.eq.s32.totalorder 0, 0
  // Predicated region
  $region10: #{mlp_forward.2} parent=0 // pred_check
    %p93 = pneg %p92
  $region11: #{mlp_forward.2} parent=0 // pred_check_branch
    %95 = sbr.rel (%p93) target = $region13
  $region12: #{mlp_forward.2} parent=0 // pred_region
    %96 = vst [vmem:[#allocation2] sm:$0xff] %v89
  $region13: #{mlp_forward.2} parent=0 // pred_fallthru
    _
  %p97 = scmp.ne.s32.totalorder 0, 0
  // Predicated region
  $region14: #{mlp_forward.2} parent=0 // pred_check
    %p98 = pneg %p97
  $region15: #{mlp_forward.2} parent=0 // pred_check_branch
    %100 = sbr.rel (%p98) target = $region17
  $region16: #{mlp_forward.2} parent=0 // pred_region
    %v101 = vld [vmem:[#allocation2] sm:$0xff]
    %v102 = vadd.f32 %v101, %v89
    %103 = vst [vmem:[#allocation2] sm:$0xff] %v102
  $region17: #{mlp_forward.2} parent=0 // pred_fallthru
    _
  // Predicated region
  $region18: #{mlp_forward.2} parent=0 // pred_check
    %p104 = pneg %p92
  $region19: #{mlp_forward.2} parent=0 // pred_check_branch
    %106 = sbr.rel (%p104) target = $region21
  $region20: #{mlp_forward.2} parent=0 // pred_region
    %v107 = vld [vmem:[#allocation2] sm:$0xff]
    %v108 = vpack.c.bf16 %v107, %v107
    %109 = vst [vmem:[%s2] sm:$0xf] %v108
    %v110 = vrot.slane %v107, 4
    %v111 = vadd.f32 %v107, %v110
    %v112 = vrot.slane %v111, 2
    %v113 = vadd.f32 %v111, %v112
    %v114 = vrot.slane %v113, 1
    %v115 = vadd.f32 %v113, %v114
    %116 = vst [vmem:[%s3] sm:$0x1] %v115
    %v117 = vmul.f32 %v107, %v107
    %v118 = vrot.slane %v117, 4
    %v119 = vadd.f32 %v117, %v118
    %v120 = vrot.slane %v119, 2
    %v121 = vadd.f32 %v119, %v120
    %v122 = vrot.slane %v121, 1
    %v123 = vadd.f32 %v121, %v122
    %124 = vst [vmem:[%s4] sm:$0x1] %v123
  $region21: #{mlp_forward.2} parent=0 // pred_fallthru
    _
  // Predicated region
  $region22: #{mlp_forward.2} parent=0 // pred_check
    _
  $region23: #{mlp_forward.2} parent=0 // pred_check_branch
    %126 = sbr.rel (0) target = $region25
  $region24: #{mlp_forward.2} parent=0 // pred_region
    _
  $region25: #{mlp_forward.2} parent=0 // pred_fallthru
    _
  // Predicated region
  $region26: #{mlp_forward.2} parent=0 // pred_check
    _
  $region27: #{mlp_forward.2} parent=0 // pred_check_branch
    %128 = sbr.rel (0) target = $region29
  $region28: #{mlp_forward.2} parent=0 // pred_region
    _
  $region29: #{mlp_forward.2} parent=0 // pred_fallthru
    _
  // Predicated region
  $region30: #{mlp_forward.2} parent=0 // pred_check
    _
  $region31: #{mlp_forward.2} parent=0 // pred_check_branch
    %130 = sbr.rel (0) target = $region33
  $region32: #{mlp_forward.2} parent=0 // pred_region
    _
  $region33: #{mlp_forward.2} parent=0 // pred_fallthru
    _
  // Predicated region
  $region34: #{mlp_forward.2} parent=0 // pred_check
    _
  $region35: #{mlp_forward.2} parent=0 // pred_check_branch
    %132 = sbr.rel (0) target = $region37
  $region36: #{mlp_forward.2} parent=0 // pred_region
    _
  $region37: #{mlp_forward.2} parent=0 // pred_fallthru
    _
  // Predicated region
  $region38: #{mlp_forward.2} parent=0 // pred_check
    _
  $region39: #{mlp_forward.2} parent=0 // pred_check_branch
    %134 = sbr.rel (0) target = $region41
  $region40: #{mlp_forward.2} parent=0 // pred_region
    _
  $region41: #{mlp_forward.2} parent=0 // pred_fallthru
    _
  // Predicated region
  $region42: #{mlp_forward.2} parent=0 // pred_check
    _
  $region43: #{mlp_forward.2} parent=0 // pred_check_branch
    %136 = sbr.rel (0) target = $region45
  $region44: #{mlp_forward.2} parent=0 // pred_region
    _
  $region45: #{mlp_forward.2} parent=0 // pred_fallthru
    _

// kernel: mlp_forward.3
$region0: #{mlp_forward.3}
  #allocation0 [shape = 'u32[]', space=smem, size = 0x4, offset = 0x4, fixed_abs, tag = 'smem constant byte address 0x4 - core index']
  #allocation1 [shape = 'u32[72,128]{1,0:T(1,128)}', space=vmem, size = 0x9000, scoped, tag = 'internal scratch']
  #allocation2 [shape = 'f32[8,128]{1,0:T(8,128)}', space=vmem, size = 0x1000, scoped, tag = 'scratch operand']
  %s0 = inlined_call_operand.vmem [shape: bf16[8,128], index: 0, kind: input, shape index: {}]
  %s1 = inlined_call_operand.vmem [shape: f32[1,128], index: 1, kind: input, shape index: {}]
  %s2 = inlined_call_operand.vmem [shape: f32[1,128], index: 2, kind: input, shape index: {}]
  %s3 = inlined_call_operand.vmem [shape: bf16[128,128], index: 3, kind: input, shape index: {}]
  %s4 = inlined_call_operand.vmem [shape: f32[1,128], index: 4, kind: input, shape index: {}]
  %s5 = inlined_call_operand.hbm [shape: f32[8,128], index: 5, kind: output, shape index: {}]
  %s6 = sld [smem:[#allocation0]]
  $region42: #{mlp_forward.3} parent=0
    _
  %s8 = ssub.s32 1, %s6
  %s9 = scalar_select 0, %s8, %s6
  $region1: #{mlp_forward.3} parent=0
    #allocation3 [shape = 'u8[4096]{0}', space=vmem, size = 0x1000, scoped, tag = 'output window, operand 0, single buffered']
    #allocation4 [shape = 's32[1]{0}', space=sflag, size = 0x4, scoped, tag = 'scoped memory for mlp_forward.3']
    %10 = vsyncpa [#allocation4], 0
    // Predicated region
    $region2: #{mlp_forward.3} parent=1 // pred_check
      _
    $region3: #{mlp_forward.3} parent=1 // pred_check_branch
      %12 = sbr.rel (0) target = $region5
    $region4: #{mlp_forward.3} parent=1 // pred_region
      _
    $region5: #{mlp_forward.3} parent=1 // pred_fallthru
      _
    // Predicated region
    $region6: #{mlp_forward.3} parent=1 // pred_check
      _
    $region7: #{mlp_forward.3} parent=1 // pred_check_branch
      %14 = sbr.rel (0) target = $region9
    $region8: #{mlp_forward.3} parent=1 // pred_region
      _
    $region9: #{mlp_forward.3} parent=1 // pred_fallthru
      _
    // Predicated region
    $region10: #{mlp_forward.3} parent=1 // pred_check
      _
    $region11: #{mlp_forward.3} parent=1 // pred_check_branch
      %16 = sbr.rel (0) target = $region13
    $region12: #{mlp_forward.3} parent=1 // pred_region
      _
    $region13: #{mlp_forward.3} parent=1 // pred_fallthru
      _
    // Predicated region
    $region14: #{mlp_forward.3} parent=1 // pred_check
      _
    $region15: #{mlp_forward.3} parent=1 // pred_check_branch
      %18 = sbr.rel (0) target = $region17
    $region16: #{mlp_forward.3} parent=1 // pred_region
      _
    $region17: #{mlp_forward.3} parent=1 // pred_fallthru
      _
    // Predicated region
    $region18: #{mlp_forward.3} parent=1 // pred_check
      _
    $region19: #{mlp_forward.3} parent=1 // pred_check_branch
      %20 = sbr.rel (0) target = $region21
    $region20: #{mlp_forward.3} parent=1 // pred_region
      _
    $region21: #{mlp_forward.3} parent=1 // pred_fallthru
      _
    %s21 = smul.u32 0, 128
    %s22 = sshra.s32 %s21, 7
    %s23 = sand.u32 %s21, 127
    %s24 = scalar_lea.vmem %s1, %s22
    %v25 = vld [vmem:[%s24] sm:$0x1]
    %s26 = scalar_lea.vmem %s2, %s22
    %v27 = vld [vmem:[%s26] sm:$0x1]
    %v28 = vld [vmem:[%s0] sm:$0xf]
    %v29 = vunpack.c.l.bf16 %v28
    %v31 = vperm.slane %v25, 0
    %v33 = vmul.f32 %v29, %v31
    %v35 = vperm.slane %v27, 0
    %v37 = vadd.f32 %v33, %v35
    %v38 = vmax.f32 %v37, 0.0
    %v39 = vpack.c.bf16 %v38, %v38
    %v40 = vld [vmem:[%s3] sm:$0xf]
    %v41 = vld [vmem:[%s3 + $0x4] sm:$0xf]
    %v42 = vld [vmem:[%s3 + $0x8] sm:$0xf]
    %v43 = vld [vmem:[%s3 + $0xc] sm:$0xf]
    %v44 = vld [vmem:[%s3 + $0x10] sm:$0xf]
    %v45 = vld [vmem:[%s3 + $0x14] sm:$0xf]
    %v46 = vld [vmem:[%s3 + $0x18] sm:$0xf]
    %v47 = vld [vmem:[%s3 + $0x1c] sm:$0xf]
    %v48 = vld [vmem:[%s3 + $0x20] sm:$0xf]
    %v49 = vld [vmem:[%s3 + $0x24] sm:$0xf]
    %v50 = vld [vmem:[%s3 + $0x28] sm:$0xf]
    %v51 = vld [vmem:[%s3 + $0x2c] sm:$0xf]
    %v52 = vld [vmem:[%s3 + $0x30] sm:$0xf]
    %v53 = vld [vmem:[%s3 + $0x34] sm:$0xf]
    %v54 = vld [vmem:[%s3 + $0x38] sm:$0xf]
    %v55 = vld [vmem:[%s3 + $0x3c] sm:$0xf]
    %v72 = vunpack.c.l.b16 %v40
    %v73 = vunpack.c.l.b16 %v41
    %v74 = vunpack.c.l.b16 %v42
    %v75 = vunpack.c.l.b16 %v43
    %v76 = vunpack.c.l.b16 %v44
    %v77 = vunpack.c.l.b16 %v45
    %v78 = vunpack.c.l.b16 %v46
    %v79 = vunpack.c.l.b16 %v47
    %v80 = vunpack.c.l.b16 %v48
    %v81 = vunpack.c.l.b16 %v49
    %v82 = vunpack.c.l.b16 %v50
    %v83 = vunpack.c.l.b16 %v51
    %v84 = vunpack.c.l.b16 %v52
    %v85 = vunpack.c.l.b16 %v53
    %v86 = vunpack.c.l.b16 %v54
    %v87 = vunpack.c.l.b16 %v55
    %v88 = vpack.c.b16 %v73, %v72
    %v89 = vpack.c.b16 %v75, %v74
    %v90 = vpack.c.b16 %v77, %v76
    %v91 = vpack.c.b16 %v79, %v78
    %v92 = vpack.c.b16 %v81, %v80
    %v93 = vpack.c.b16 %v83, %v82
    %v94 = vpack.c.b16 %v85, %v84
    %v95 = vpack.c.b16 %v87, %v86
    %104 = vmatpush.bf16.msra.mxu0 %v95
    %105 = vmatpush.bf16.msra.mxu0 %v94
    %106 = vmatpush.bf16.msra.mxu0 %v93
    %107 = vmatpush.bf16.msra.mxu0 %v92
    %108 = vmatpush.bf16.msra.mxu0 %v91
    %109 = vmatpush.bf16.msra.mxu0 %v90
    %110 = vmatpush.bf16.msra.mxu0 %v89
    %111 = vmatpush.bf16.msra.mxu0 %v88
    %112 = vmatmul.bf16.gmra.mxu0 %v39
    %v113 = vpop.f32.mrf.mxu0
    %v114 = vadd.f32 0.0, %v113
    %v115 = vpop.f32.mrf.mxu0
    %116 = vdwg.mxu0
    %p117 = scmp.eq.s32.totalorder 0, 0
    // Predicated region
    $region22: #{mlp_forward.3} parent=1 // pred_check
      %p118 = pneg %p117
    $region23: #{mlp_forward.3} parent=1 // pred_check_branch
      %120 = sbr.rel (%p118) target = $region25
    $region24: #{mlp_forward.3} parent=1 // pred_region
      %121 = vst [vmem:[#allocation2] sm:$0xff] %v114
    $region25: #{mlp_forward.3} parent=1 // pred_fallthru
      _
    %p122 = scmp.ne.s32.totalorder 0, 0
    // Predicated region
    $region26: #{mlp_forward.3} parent=1 // pred_check
      %p123 = pneg %p122
    $region27: #{mlp_forward.3} parent=1 // pred_check_branch
      %125 = sbr.rel (%p123) target = $region29
    $region28: #{mlp_forward.3} parent=1 // pred_region
      %v126 = vld [vmem:[#allocation2] sm:$0xff]
      %v127 = vadd.f32 %v126, %v114
      %128 = vst [vmem:[#allocation2] sm:$0xff] %v127
    $region29: #{mlp_forward.3} parent=1 // pred_fallthru
      _
    // Predicated region
    $region30: #{mlp_forward.3} parent=1 // pred_check
      %p129 = pneg %p117
    $region31: #{mlp_forward.3} parent=1 // pred_check_branch
      %131 = sbr.rel (%p129) target = $region33
    $region32: #{mlp_forward.3} parent=1 // pred_region
      %s132 = smul.u32 0, 128
      %v133 = vld [vmem:[#allocation2] sm:$0xff]
      %s134 = sshra.s32 %s132, 7
      %s135 = sand.u32 %s132, 127
      %s136 = scalar_lea.vmem %s4, %s134
      %v137 = vld [vmem:[%s136] sm:$0x1]
      %v139 = vperm.slane %v137, 0
      %v141 = vadd.f32 %v133, %v139
      %142 = vst [vmem:[#allocation3] sm:$0xff] %v141
    $region33: #{mlp_forward.3} parent=1 // pred_fallthru
      _
    // Predicated region
    $region34: #{mlp_forward.3} parent=1 // pred_check
      _
    $region35: #{mlp_forward.3} parent=1 // pred_check_branch
      %144 = sbr.rel (0) target = $region37
    $region36: #{mlp_forward.3} parent=1 // pred_region
      %146 = vsyncadd [#allocation4], 0
      %s148 = sshll.u32 [#allocation3], 4
      %s149 = int_to_ptr.vmem [resolvable:$true] %s148
      %s150 = sshll.u32 %s5, 4
      %s151 = int_to_ptr.hbm [resolvable:$true] %s150
      %153 = dma.vmem_to_hbm [thread:$0]  %s149, 128, %s151, [#allocation4]
    $region37: #{mlp_forward.3} parent=1 // pred_fallthru
      _
    // Predicated region
    $region38: #{mlp_forward.3} parent=1 // pred_check
      _
    $region39: #{mlp_forward.3} parent=1 // pred_check_branch
      %155 = sbr.rel (0) target = $region41
    $region40: #{mlp_forward.3} parent=1 // pred_region
      %157 = dma.done [#allocation4], 128
    $region41: #{mlp_forward.3} parent=1 // pred_fallthru
      _
    %158 = vsyncpa [#allocation4], 1

</llo_original>
